<compile_context>
chip_gen: v5e
topology: v5e:2x2
jax: 0.10.0
libtpu: 0.0.40
codegen_flags: <defaults>
</compile_context>

<pallas_src>
import functools

import jax
import jax.numpy as jnp
from jax.experimental import pallas as pl
from jax.experimental.pallas import tpu as pltpu


def _round_up(a: int, b: int) -> int:
    return (a + b - 1) // b * b


def _prosody_embed_kernel(x_ref, lo_ref, hi_ref, tab_t_ref, out_ref):
    """x_ref:   (2, TILE_N)       row 0 = pitch, row 1 = energy (tokens on lanes)
       lo_ref:  (2*n_bins, 1)     bucket lower bounds (pitch buckets, then energy)
       hi_ref:  (2*n_bins, 1)     bucket upper bounds (pitch buckets, then energy)
       tab_t:   (H, 2*n_bins)     [pitch_tab; energy_tab] transposed
       out_ref: (H, TILE_N)       pitch_reps + energy_reps, tokens on lanes
    """
    two_nb = lo_ref.shape[0]
    n_bins = two_nb // 2
    tile_n = x_ref.shape[1]

    xb = x_ref[...]                              # (2, TILE_N)
    pitch = xb[0:1, :]                           # (1, TILE_N)
    energy = xb[1:2, :]                          # (1, TILE_N)

    # Replicate pitch into the first n_bins rows and energy into the last
    # n_bins rows so one pair of interval compares handles both lookups.
    row = jax.lax.broadcasted_iota(jnp.int32, (two_nb, tile_n), 0)
    vals = jnp.where(row < n_bins,
                     jnp.broadcast_to(pitch, (two_nb, tile_n)),
                     jnp.broadcast_to(energy, (two_nb, tile_n)))

    # torch.bucketize(v, bins, right=False): bucket b holds lo[b] < v <= hi[b]
    # with lo = [-inf, bins], hi = [bins, +inf].  Pure VPU compares, no XLU.
    onehot = jnp.logical_and(vals > lo_ref[...], vals <= hi_ref[...])
    onehot = onehot.astype(jnp.float32)          # (2*n_bins, TILE_N)

    # Fused embedding lookup: one MXU matmul gives pitch_reps + energy_reps.
    out_ref[...] = jnp.dot(
        tab_t_ref[...], onehot,
        preferred_element_type=jnp.float32,
        precision=jax.lax.Precision.HIGHEST,
    ).astype(out_ref.dtype)


@functools.partial(jax.jit, static_argnames=("tile_n_max",))
def discrete_prosodic_net(x, pitch_bins, energy_bins, pitch_tab, energy_tab,
                          *, tile_n_max=1024):
    """x: [B, T, 2] float32 -> prosodic_reps: [B, T, H] float32."""
    B, T, C = x.shape
    assert C == 2
    n_bins, H = pitch_tab.shape
    N = B * T

    # Lane-dense token tile (multiple of 128); pad the token count to it.
    tile_n = min(int(tile_n_max), _round_up(N, 128))
    n_pad = _round_up(N, tile_n)
    grid_n = n_pad // tile_n

    # Tokens on the lane axis: (2, N_pad) with row 0 = pitch, row 1 = energy.
    xt = x.reshape(N, 2).astype(jnp.float32).T
    xt = jnp.pad(xt, ((0, 0), (0, n_pad - N)))

    # Bucket interval bounds and fused (transposed) embedding table.
    inf = jnp.array([jnp.inf], dtype=jnp.float32)
    pbins = pitch_bins.astype(jnp.float32)
    ebins = energy_bins.astype(jnp.float32)
    lo = jnp.concatenate([-inf, pbins, -inf, ebins]).reshape(2 * n_bins, 1)
    hi = jnp.concatenate([pbins, inf, ebins, inf]).reshape(2 * n_bins, 1)
    tab_t = jnp.concatenate(
        [pitch_tab, energy_tab], axis=0).astype(jnp.float32).T   # (H, 2*n_bins)

    out = pl.pallas_call(
        _prosody_embed_kernel,
        out_shape=jax.ShapeDtypeStruct((H, n_pad), jnp.float32),
        grid=(grid_n,),
        in_specs=[
            pl.BlockSpec((2, tile_n), lambda i: (0, i)),           # x (tiled)
            pl.BlockSpec((2 * n_bins, 1), lambda i: (0, 0)),       # lo (resident)
            pl.BlockSpec((2 * n_bins, 1), lambda i: (0, 0)),       # hi (resident)
            pl.BlockSpec((H, 2 * n_bins), lambda i: (0, 0)),       # table (resident)
        ],
        out_specs=pl.BlockSpec((H, tile_n), lambda i: (0, i)),
        compiler_params=pltpu.CompilerParams(
            dimension_semantics=("parallel",)),
    )(xt, lo, hi, tab_t)

    # (H, N_pad) -> [B, T, H]; cheap layout transpose outside the kernel.
    return out[:, :N].T.reshape(B, T, H)


def _reference(x, pitch_bins, energy_bins, pitch_tab, energy_tab):
    # Pure-JAX reference (searchsorted side='left' == torch.bucketize right=False).
    p_idx = jnp.searchsorted(pitch_bins, x[:, :, 0], side="left")
    e_idx = jnp.searchsorted(energy_bins, x[:, :, 1], side="left")
    return jnp.take(pitch_tab, p_idx, axis=0) + jnp.take(energy_tab, e_idx, axis=0)


if __name__ == "__main__":
    # Config (synthetic, deterministic): n_bins=16, hidden_dim=32, B=2, T=8.
    n_bins = 16
    hidden_dim = 32
    B, T = 2, 8

    key = jax.random.PRNGKey(0)
    kx, kp, ke = jax.random.split(key, 3)

    # Stats that would have come from prosodic_stats_path (synthetic).
    pitch_min, pitch_max = -1.5, 1.5
    energy_min, energy_max = -1.0, 2.0
    pitch_bins = jnp.linspace(pitch_min, pitch_max, n_bins - 1)
    energy_bins = jnp.linspace(energy_min, energy_max, n_bins - 1)

    # Embedding tables (nn.Embedding(n_bins, hidden_dim)).
    pitch_tab = jax.random.normal(kp, (n_bins, hidden_dim), dtype=jnp.float32)
    energy_tab = jax.random.normal(ke, (n_bins, hidden_dim), dtype=jnp.float32)

    # Input: [B, T, 2] (pitch, energy per token).
    x = jax.random.normal(kx, (B, T, 2), dtype=jnp.float32)

    out = discrete_prosodic_net(x, pitch_bins, energy_bins, pitch_tab, energy_tab)
    out = jax.block_until_ready(out)

    ref = _reference(x, pitch_bins, energy_bins, pitch_tab, energy_tab)
    assert out.shape == (B, T, hidden_dim)
    assert jnp.allclose(out, ref, atol=1e-5), "mismatch vs pure-JAX reference"

    print("KERNEL_OK")
</pallas_src>

<mosaic_0001>
module attributes {stable_mosaic.version = 11 : i64} {
  func.func @_prosody_embed_kernel(%arg0: i32, %arg1: memref<2x128xf32, #tpu.memory_space<vmem>>, %arg2: memref<32x1xf32, #tpu.memory_space<vmem>>, %arg3: memref<32x1xf32, #tpu.memory_space<vmem>>, %arg4: memref<32x32xf32, #tpu.memory_space<vmem>>, %arg5: memref<32x128xf32, #tpu.memory_space<vmem>>) attributes {dimension_semantics = [#tpu.dimension_semantics<parallel>], iteration_bounds = array<i64: 1>, scalar_prefetch = 0 : i64, scratch_operands = 0 : i64, tpu.core_type = #tpu.core_type<tc>, window_params = [{transform_indices = @transform_0, window_bounds = array<i64: 2, 128>}, {pipeline_mode = #tpu.pipeline_mode<synchronous>, transform_indices = @transform_1, window_bounds = array<i64: 32, 1>}, {pipeline_mode = #tpu.pipeline_mode<synchronous>, transform_indices = @transform_2, window_bounds = array<i64: 32, 1>}, {pipeline_mode = #tpu.pipeline_mode<synchronous>, transform_indices = @transform_3, window_bounds = array<i64: 32, 32>}, {transform_indices = @transform_4, window_bounds = array<i64: 32, 128>}]} {
    %c0 = arith.constant 0 : index
    %c0_0 = arith.constant 0 : index
    %0 = vector.load %arg1[%c0, %c0_0] : memref<2x128xf32, #tpu.memory_space<vmem>>, vector<2x128xf32>
    %1 = vector.extract_strided_slice %0 {offsets = [0, 0], sizes = [1, 128], strides = [1, 1]} : vector<2x128xf32> to vector<1x128xf32>
    %2 = vector.extract_strided_slice %0 {offsets = [1, 0], sizes = [1, 128], strides = [1, 1]} : vector<2x128xf32> to vector<1x128xf32>
    %3 = tpu.iota {dimensions = array<i32: 0>} : vector<32x128xi32>
    %c16_i32 = arith.constant 16 : i32
    %4 = vector.broadcast %c16_i32 : i32 to vector<32x128xi32>
    %5 = arith.cmpi slt, %3, %4 : vector<32x128xi32>
    %6 = vector.shape_cast %1 : vector<1x128xf32> to vector<1x128xf32>
    %7 = vector.broadcast %6 : vector<1x128xf32> to vector<32x128xf32>
    %8 = vector.shape_cast %2 : vector<1x128xf32> to vector<1x128xf32>
    %9 = vector.broadcast %8 : vector<1x128xf32> to vector<32x128xf32>
    %10 = arith.select %5, %7, %9 : vector<32x128xi1>, vector<32x128xf32>
    %c0_1 = arith.constant 0 : index
    %c0_2 = arith.constant 0 : index
    %11 = vector.load %arg2[%c0_1, %c0_2] : memref<32x1xf32, #tpu.memory_space<vmem>>, vector<32x1xf32>
    %12 = vector.broadcast %11 : vector<32x1xf32> to vector<32x128xf32>
    %13 = arith.cmpf ogt, %10, %12 : vector<32x128xf32>
    %c0_3 = arith.constant 0 : index
    %c0_4 = arith.constant 0 : index
    %14 = vector.load %arg3[%c0_3, %c0_4] : memref<32x1xf32, #tpu.memory_space<vmem>>, vector<32x1xf32>
    %15 = vector.broadcast %14 : vector<32x1xf32> to vector<32x128xf32>
    %16 = arith.cmpf ole, %10, %15 : vector<32x128xf32>
    %17 = arith.andi %13, %16 : vector<32x128xi1>
    %18 = arith.extui %17 : vector<32x128xi1> to vector<32x128xi32>
    %19 = arith.sitofp %18 : vector<32x128xi32> to vector<32x128xf32>
    %c0_5 = arith.constant 0 : index
    %c0_6 = arith.constant 0 : index
    %20 = vector.load %arg4[%c0_5, %c0_6] : memref<32x32xf32, #tpu.memory_space<vmem>>, vector<32x32xf32>
    %cst = arith.constant dense<0.000000e+00> : vector<32x128xf32>
    %21 = tpu.matmul %20, %19, %cst {dimension_numbers = #tpu.dot_dimension_numbers<[1], [0], [0], [1], [0, 0, 1, 1], [], []>, precision = #tpu.contract_precision<fp32>} : vector<32x32xf32>, vector<32x128xf32>, vector<32x128xf32> -> vector<32x128xf32>
    %c0_7 = arith.constant 0 : index
    %c0_8 = arith.constant 0 : index
    %22 = vector.load %arg5[%c0_7, %c0_8] : memref<32x128xf32, #tpu.memory_space<vmem>>, vector<32x128xf32>
    tpu.vector_store %arg5[%c0_7, %c0_8], %21 {strides = array<i32>} : memref<32x128xf32, #tpu.memory_space<vmem>>, vector<32x128xf32>,
    return
  }
  func.func @transform_0(%arg0: i32) -> (i32, i32) {
    %c0_i32 = arith.constant 0 : i32
    %c0_i32_0 = arith.constant 0 : i32
    return %c0_i32, %arg0 : i32, i32
  }
  func.func @transform_1(%arg0: i32) -> (i32, i32) {
    %c0_i32 = arith.constant 0 : i32
    %c0_i32_0 = arith.constant 0 : i32
    %c0_i32_1 = arith.constant 0 : i32
    return %c0_i32, %c0_i32_0 : i32, i32
  }
  func.func @transform_2(%arg0: i32) -> (i32, i32) {
    %c0_i32 = arith.constant 0 : i32
    %c0_i32_0 = arith.constant 0 : i32
    %c0_i32_1 = arith.constant 0 : i32
    return %c0_i32, %c0_i32_0 : i32, i32
  }
  func.func @transform_3(%arg0: i32) -> (i32, i32) {
    %c0_i32 = arith.constant 0 : i32
    %c0_i32_0 = arith.constant 0 : i32
    %c0_i32_1 = arith.constant 0 : i32
    return %c0_i32, %c0_i32_0 : i32, i32
  }
  func.func @transform_4(%arg0: i32) -> (i32, i32) {
    %c0_i32 = arith.constant 0 : i32
    %c0_i32_0 = arith.constant 0 : i32
    return %c0_i32, %arg0 : i32, i32
  }
}

</mosaic_0001>

<llo_original>
// kernel: discrete_prosodic_net.1
$region0: #{discrete_prosodic_net.1}
  #allocation0 [shape = 'u32[]', space=smem, size = 0x4, offset = 0x4, fixed_abs, tag = 'smem constant byte address 0x4 - core index']
  #allocation1 [shape = 'u32[72,128]{1,0:T(1,128)}', space=vmem, size = 0x9000, scoped, tag = 'internal scratch']
  %s0 = inlined_call_operand.vmem [shape: f32[2,128], index: 0, kind: input, shape index: {}]
  %s1 = inlined_call_operand.vmem [shape: f32[32,1], index: 1, kind: input, shape index: {}]
  %s2 = inlined_call_operand.vmem [shape: f32[32,1], index: 2, kind: input, shape index: {}]
  %s3 = inlined_call_operand.vmem [shape: f32[32,32], index: 3, kind: input, shape index: {}]
  %s4 = inlined_call_operand.vmem [shape: f32[32,128], index: 4, kind: output, shape index: {}]
  %s5 = sld [smem:[#allocation0]]
  $region26: #{discrete_prosodic_net.1} parent=0
    _
  %s7 = ssub.s32 1, %s5
  %s8 = scalar_select 0, %s7, %s5
  // Predicated region
  $region2: #{discrete_prosodic_net.1} parent=0 // pred_check
    _
  $region3: #{discrete_prosodic_net.1} parent=0 // pred_check_branch
    %10 = sbr.rel (0) target = $region5
  $region4: #{discrete_prosodic_net.1} parent=0 // pred_region
    _
  $region5: #{discrete_prosodic_net.1} parent=0 // pred_fallthru
    _
  // Predicated region
  $region6: #{discrete_prosodic_net.1} parent=0 // pred_check
    _
  $region7: #{discrete_prosodic_net.1} parent=0 // pred_check_branch
    %12 = sbr.rel (0) target = $region9
  $region8: #{discrete_prosodic_net.1} parent=0 // pred_region
    _
  $region9: #{discrete_prosodic_net.1} parent=0 // pred_fallthru
    _
  // Predicated region
  $region10: #{discrete_prosodic_net.1} parent=0 // pred_check
    _
  $region11: #{discrete_prosodic_net.1} parent=0 // pred_check_branch
    %14 = sbr.rel (0) target = $region13
  $region12: #{discrete_prosodic_net.1} parent=0 // pred_region
    _
  $region13: #{discrete_prosodic_net.1} parent=0 // pred_fallthru
    _
  // Predicated region
  $region14: #{discrete_prosodic_net.1} parent=0 // pred_check
    _
  $region15: #{discrete_prosodic_net.1} parent=0 // pred_check_branch
    %16 = sbr.rel (0) target = $region17
  $region16: #{discrete_prosodic_net.1} parent=0 // pred_region
    _
  $region17: #{discrete_prosodic_net.1} parent=0 // pred_fallthru
    _
  %v17 = vld [vmem:[%s0] sm:$0x3]
  %v18 = vlaneseq
  %v19 = vshrl.u32 %v18, 7
  %v20 = vadd.s32 %v19, 8
  %v21 = vadd.s32 %v19, 16
  %v22 = vadd.s32 %v19, 24
  %vm23 = vcmp.lt.s32.totalorder %v19, 16
  %vm24 = vcmp.lt.s32.totalorder %v20, 16
  %vm25 = vcmp.lt.s32.totalorder %v21, 16
  %vm26 = vcmp.lt.s32.totalorder %v22, 16
  %v27 = vperm.slane %v17, 0
  %v28 = vperm.slane %v17, 1
  %v29 = vsel %vm23, %v27, %v28
  %v30 = vsel %vm24, %v27, %v28
  %v31 = vsel %vm25, %v27, %v28
  %v32 = vsel %vm26, %v27, %v28
  %v33 = vld [vmem:[%s1] sm:$0xff]
  %v34 = vld [vmem:[%s1 + $0x8] sm:$0xff]
  %v35 = vld [vmem:[%s1 + $0x10] sm:$0xff]
  %v36 = vld [vmem:[%s1 + $0x18] sm:$0xff]
  %38 = vset.pattern.permute.xlu0 0
  %39 = vperm.xlu0 %38, %v33
  %v40 = vpop.permute.xlu0 %39
  %43 = vset.pattern.permute.xlu0 0
  %44 = vperm.xlu0 %43, %v34
  %v45 = vpop.permute.xlu0 %44
  %48 = vset.pattern.permute.xlu0 0
  %49 = vperm.xlu0 %48, %v35
  %v50 = vpop.permute.xlu0 %49
  %53 = vset.pattern.permute.xlu0 0
  %54 = vperm.xlu0 %53, %v36
  %v55 = vpop.permute.xlu0 %54
  %vm57 = vcmp.gt.f32.partialorder %v29, %v40
  %vm58 = vcmp.gt.f32.partialorder %v30, %v45
  %vm59 = vcmp.gt.f32.partialorder %v31, %v50
  %vm60 = vcmp.gt.f32.partialorder %v32, %v55
  %v61 = vld [vmem:[%s2] sm:$0xff]
  %v62 = vld [vmem:[%s2 + $0x8] sm:$0xff]
  %v63 = vld [vmem:[%s2 + $0x10] sm:$0xff]
  %v64 = vld [vmem:[%s2 + $0x18] sm:$0xff]
  %66 = vset.pattern.permute.xlu0 0
  %67 = vperm.xlu0 %66, %v61
  %v68 = vpop.permute.xlu0 %67
  %71 = vset.pattern.permute.xlu0 0
  %72 = vperm.xlu0 %71, %v62
  %v73 = vpop.permute.xlu0 %72
  %76 = vset.pattern.permute.xlu0 0
  %77 = vperm.xlu0 %76, %v63
  %v78 = vpop.permute.xlu0 %77
  %81 = vset.pattern.permute.xlu0 0
  %82 = vperm.xlu0 %81, %v64
  %v83 = vpop.permute.xlu0 %82
  %vm85 = vcmp.le.f32.partialorder %v29, %v68
  %vm86 = vcmp.le.f32.partialorder %v30, %v73
  %vm87 = vcmp.le.f32.partialorder %v31, %v78
  %vm88 = vcmp.le.f32.partialorder %v32, %v83
  %vm89 = vmand %vm57, %vm85
  %vm90 = vmand %vm58, %vm86
  %vm91 = vmand %vm59, %vm87
  %vm92 = vmand %vm60, %vm88
  %v93 = vsel %vm89, 1, 0
  %v94 = vsel %vm90, 1, 0
  %v95 = vsel %vm91, 1, 0
  %v96 = vsel %vm92, 1, 0
  %v97 = vcvt.s32.f32 %v93
  %v98 = vcvt.s32.f32 %v94
  %v99 = vcvt.s32.f32 %v95
  %v100 = vcvt.s32.f32 %v96
  %v101 = vld [vmem:[%s3] sm:$0xff]
  %v102 = vld [vmem:[%s3 + $0x8] sm:$0xff]
  %v103 = vld [vmem:[%s3 + $0x10] sm:$0xff]
  %v104 = vld [vmem:[%s3 + $0x18] sm:$0xff]
  %vm105 = vcmask 261120
  %v107 = vsel %vm105, %v101, 0
  %v110 = vsel %vm105, %v102, 0
  %v113 = vsel %vm105, %v103, 0
  %v116 = vsel %vm105, %v104, 0
  %118 = vmatpush.msra.mxu0 0.0
  %119 = vmatpush.msra.mxu0 0.0
  %120 = vmatpush.msra.mxu0 0.0
  %121 = vmatpush.msra.mxu0 0.0
  %122 = vmatpush.msra.mxu0 0.0
  %123 = vmatpush.msra.mxu0 0.0
  %124 = vmatpush.msra.mxu0 0.0
  %125 = vmatpush.msra.mxu0 0.0
  %126 = vmatpush.msra.mxu0 0.0
  %127 = vmatpush.msra.mxu0 0.0
  %128 = vmatpush.msra.mxu0 0.0
  %129 = vmatpush.msra.mxu0 0.0
  %v130 = vand.u32 %v100, 4294901760
  %131 = vmatpush.msra.mxu0 %v130
  %v132 = vand.u32 %v99, 4294901760
  %133 = vmatpush.msra.mxu0 %v132
  %v134 = vand.u32 %v98, 4294901760
  %135 = vmatpush.msra.mxu0 %v134
  %v136 = vand.u32 %v97, 4294901760
  %137 = vmatpush.msra.mxu0 %v136
  %v138 = vand.u32 %v107, 4294901760
  %v139 = vsub.f32 %v107, %v138
  %v140 = vand.u32 %v139, 4294901760
  %v141 = vsub.f32 %v139, %v140
  %v142 = vand.u32 %v141, 4294901760
  %143 = vmatmul.f32.gmra.mxu0 %v142
  %v144 = vpop.f32.mrf.mxu0
  %v145 = vadd.f32 0.0, %v144
  %v146 = vand.u32 %v110, 4294901760
  %v147 = vsub.f32 %v110, %v146
  %v148 = vand.u32 %v147, 4294901760
  %v149 = vsub.f32 %v147, %v148
  %v150 = vand.u32 %v149, 4294901760
  %151 = vmatmul.f32.gmra.mxu0 %v150
  %v152 = vpop.f32.mrf.mxu0
  %v153 = vadd.f32 0.0, %v152
  %v154 = vand.u32 %v113, 4294901760
  %v155 = vsub.f32 %v113, %v154
  %v156 = vand.u32 %v155, 4294901760
  %v157 = vsub.f32 %v155, %v156
  %v158 = vand.u32 %v157, 4294901760
  %159 = vmatmul.f32.gmra.mxu0 %v158
  %v160 = vpop.f32.mrf.mxu0
  %v161 = vadd.f32 0.0, %v160
  %v162 = vand.u32 %v116, 4294901760
  %v163 = vsub.f32 %v116, %v162
  %v164 = vand.u32 %v163, 4294901760
  %v165 = vsub.f32 %v163, %v164
  %v166 = vand.u32 %v165, 4294901760
  %167 = vmatmul.f32.gmra.mxu0 %v166
  %v168 = vpop.f32.mrf.mxu0
  %v169 = vadd.f32 0.0, %v168
  %170 = vdwg.mxu0
  %171 = vmatpush.msra.mxu0 0.0
  %172 = vmatpush.msra.mxu0 0.0
  %173 = vmatpush.msra.mxu0 0.0
  %174 = vmatpush.msra.mxu0 0.0
  %175 = vmatpush.msra.mxu0 0.0
  %176 = vmatpush.msra.mxu0 0.0
  %177 = vmatpush.msra.mxu0 0.0
  %178 = vmatpush.msra.mxu0 0.0
  %179 = vmatpush.msra.mxu0 0.0
  %180 = vmatpush.msra.mxu0 0.0
  %181 = vmatpush.msra.mxu0 0.0
  %182 = vmatpush.msra.mxu0 0.0
  %v183 = vand.u32 %v100, 4294901760
  %v184 = vsub.f32 %v100, %v183
  %v185 = vand.u32 %v184, 4294901760
  %v186 = vsub.f32 %v184, %v185
  %v187 = vand.u32 %v186, 4294901760
  %188 = vmatpush.msra.mxu0 %v187
  %v189 = vand.u32 %v99, 4294901760
  %v190 = vsub.f32 %v99, %v189
  %v191 = vand.u32 %v190, 4294901760
  %v192 = vsub.f32 %v190, %v191
  %v193 = vand.u32 %v192, 4294901760
  %194 = vmatpush.msra.mxu0 %v193
  %v195 = vand.u32 %v98, 4294901760
  %v196 = vsub.f32 %v98, %v195
  %v197 = vand.u32 %v196, 4294901760
  %v198 = vsub.f32 %v196, %v197
  %v199 = vand.u32 %v198, 4294901760
  %200 = vmatpush.msra.mxu0 %v199
  %v201 = vand.u32 %v97, 4294901760
  %v202 = vsub.f32 %v97, %v201
  %v203 = vand.u32 %v202, 4294901760
  %v204 = vsub.f32 %v202, %v203
  %v205 = vand.u32 %v204, 4294901760
  %206 = vmatpush.msra.mxu0 %v205
  %v207 = vand.u32 %v107, 4294901760
  %208 = vmatmul.f32.gmra.mxu0 %v207
  %v209 = vpop.f32.mrf.mxu0
  %v210 = vadd.f32 %v145, %v209
  %v211 = vand.u32 %v110, 4294901760
  %212 = vmatmul.f32.gmra.mxu0 %v211
  %v213 = vpop.f32.mrf.mxu0
  %v214 = vadd.f32 %v153, %v213
  %v215 = vand.u32 %v113, 4294901760
  %216 = vmatmul.f32.gmra.mxu0 %v215
  %v217 = vpop.f32.mrf.mxu0
  %v218 = vadd.f32 %v161, %v217
  %v219 = vand.u32 %v116, 4294901760
  %220 = vmatmul.f32.gmra.mxu0 %v219
  %v221 = vpop.f32.mrf.mxu0
  %v222 = vadd.f32 %v169, %v221
  %223 = vdwg.mxu0
  %224 = vmatpush.msra.mxu0 0.0
  %225 = vmatpush.msra.mxu0 0.0
  %226 = vmatpush.msra.mxu0 0.0
  %227 = vmatpush.msra.mxu0 0.0
  %228 = vmatpush.msra.mxu0 0.0
  %229 = vmatpush.msra.mxu0 0.0
  %230 = vmatpush.msra.mxu0 0.0
  %231 = vmatpush.msra.mxu0 0.0
  %232 = vmatpush.msra.mxu0 0.0
  %233 = vmatpush.msra.mxu0 0.0
  %234 = vmatpush.msra.mxu0 0.0
  %235 = vmatpush.msra.mxu0 0.0
  %v236 = vand.u32 %v100, 4294901760
  %v237 = vsub.f32 %v100, %v236
  %238 = vmatpush.msra.mxu0 %v237
  %v239 = vand.u32 %v99, 4294901760
  %v240 = vsub.f32 %v99, %v239
  %241 = vmatpush.msra.mxu0 %v240
  %v242 = vand.u32 %v98, 4294901760
  %v243 = vsub.f32 %v98, %v242
  %244 = vmatpush.msra.mxu0 %v243
  %v245 = vand.u32 %v97, 4294901760
  %v246 = vsub.f32 %v97, %v245
  %247 = vmatpush.msra.mxu0 %v246
  %v248 = vand.u32 %v107, 4294901760
  %v249 = vsub.f32 %v107, %v248
  %250 = vmatmul.f32.gmra.mxu0 %v249
  %v251 = vpop.f32.mrf.mxu0
  %v252 = vadd.f32 %v210, %v251
  %v253 = vand.u32 %v110, 4294901760
  %v254 = vsub.f32 %v110, %v253
  %255 = vmatmul.f32.gmra.mxu0 %v254
  %v256 = vpop.f32.mrf.mxu0
  %v257 = vadd.f32 %v214, %v256
  %v258 = vand.u32 %v113, 4294901760
  %v259 = vsub.f32 %v113, %v258
  %260 = vmatmul.f32.gmra.mxu0 %v259
  %v261 = vpop.f32.mrf.mxu0
  %v262 = vadd.f32 %v218, %v261
  %v263 = vand.u32 %v116, 4294901760
  %v264 = vsub.f32 %v116, %v263
  %265 = vmatmul.f32.gmra.mxu0 %v264
  %v266 = vpop.f32.mrf.mxu0
  %v267 = vadd.f32 %v222, %v266
  %268 = vdwg.mxu0
  %269 = vmatpush.msra.mxu0 0.0
  %270 = vmatpush.msra.mxu0 0.0
  %271 = vmatpush.msra.mxu0 0.0
  %272 = vmatpush.msra.mxu0 0.0
  %273 = vmatpush.msra.mxu0 0.0
  %274 = vmatpush.msra.mxu0 0.0
  %275 = vmatpush.msra.mxu0 0.0
  %276 = vmatpush.msra.mxu0 0.0
  %277 = vmatpush.msra.mxu0 0.0
  %278 = vmatpush.msra.mxu0 0.0
  %279 = vmatpush.msra.mxu0 0.0
  %280 = vmatpush.msra.mxu0 0.0
  %v281 = vand.u32 %v100, 4294901760
  %282 = vmatpush.msra.mxu0 %v281
  %v283 = vand.u32 %v99, 4294901760
  %284 = vmatpush.msra.mxu0 %v283
  %v285 = vand.u32 %v98, 4294901760
  %286 = vmatpush.msra.mxu0 %v285
  %v287 = vand.u32 %v97, 4294901760
  %288 = vmatpush.msra.mxu0 %v287
  %v289 = vand.u32 %v107, 4294901760
  %v290 = vsub.f32 %v107, %v289
  %v291 = vand.u32 %v290, 4294901760
  %292 = vmatmul.f32.gmra.mxu0 %v291
  %v293 = vpop.f32.mrf.mxu0
  %v294 = vadd.f32 %v252, %v293
  %v295 = vand.u32 %v110, 4294901760
  %v296 = vsub.f32 %v110, %v295
  %v297 = vand.u32 %v296, 4294901760
  %298 = vmatmul.f32.gmra.mxu0 %v297
  %v299 = vpop.f32.mrf.mxu0
  %v300 = vadd.f32 %v257, %v299
  %v301 = vand.u32 %v113, 4294901760
  %v302 = vsub.f32 %v113, %v301
  %v303 = vand.u32 %v302, 4294901760
  %304 = vmatmul.f32.gmra.mxu0 %v303
  %v305 = vpop.f32.mrf.mxu0
  %v306 = vadd.f32 %v262, %v305
  %v307 = vand.u32 %v116, 4294901760
  %v308 = vsub.f32 %v116, %v307
  %v309 = vand.u32 %v308, 4294901760
  %310 = vmatmul.f32.gmra.mxu0 %v309
  %v311 = vpop.f32.mrf.mxu0
  %v312 = vadd.f32 %v267, %v311
  %313 = vdwg.mxu0
  %314 = vmatpush.msra.mxu0 0.0
  %315 = vmatpush.msra.mxu0 0.0
  %316 = vmatpush.msra.mxu0 0.0
  %317 = vmatpush.msra.mxu0 0.0
  %318 = vmatpush.msra.mxu0 0.0
  %319 = vmatpush.msra.mxu0 0.0
  %320 = vmatpush.msra.mxu0 0.0
  %321 = vmatpush.msra.mxu0 0.0
  %322 = vmatpush.msra.mxu0 0.0
  %323 = vmatpush.msra.mxu0 0.0
  %324 = vmatpush.msra.mxu0 0.0
  %325 = vmatpush.msra.mxu0 0.0
  %v326 = vand.u32 %v100, 4294901760
  %v327 = vsub.f32 %v100, %v326
  %v328 = vand.u32 %v327, 4294901760
  %329 = vmatpush.msra.mxu0 %v328
  %v330 = vand.u32 %v99, 4294901760
  %v331 = vsub.f32 %v99, %v330
  %v332 = vand.u32 %v331, 4294901760
  %333 = vmatpush.msra.mxu0 %v332
  %v334 = vand.u32 %v98, 4294901760
  %v335 = vsub.f32 %v98, %v334
  %v336 = vand.u32 %v335, 4294901760
  %337 = vmatpush.msra.mxu0 %v336
  %v338 = vand.u32 %v97, 4294901760
  %v339 = vsub.f32 %v97, %v338
  %v340 = vand.u32 %v339, 4294901760
  %341 = vmatpush.msra.mxu0 %v340
  %v342 = vand.u32 %v107, 4294901760
  %343 = vmatmul.f32.gmra.mxu0 %v342
  %v344 = vpop.f32.mrf.mxu0
  %v345 = vadd.f32 %v294, %v344
  %v346 = vand.u32 %v110, 4294901760
  %347 = vmatmul.f32.gmra.mxu0 %v346
  %v348 = vpop.f32.mrf.mxu0
  %v349 = vadd.f32 %v300, %v348
  %v350 = vand.u32 %v113, 4294901760
  %351 = vmatmul.f32.gmra.mxu0 %v350
  %v352 = vpop.f32.mrf.mxu0
  %v353 = vadd.f32 %v306, %v352
  %v354 = vand.u32 %v116, 4294901760
  %355 = vmatmul.f32.gmra.mxu0 %v354
  %v356 = vpop.f32.mrf.mxu0
  %v357 = vadd.f32 %v312, %v356
  %358 = vdwg.mxu0
  %359 = vmatpush.msra.mxu0 0.0
  %360 = vmatpush.msra.mxu0 0.0
  %361 = vmatpush.msra.mxu0 0.0
  %362 = vmatpush.msra.mxu0 0.0
  %363 = vmatpush.msra.mxu0 0.0
  %364 = vmatpush.msra.mxu0 0.0
  %365 = vmatpush.msra.mxu0 0.0
  %366 = vmatpush.msra.mxu0 0.0
  %367 = vmatpush.msra.mxu0 0.0
  %368 = vmatpush.msra.mxu0 0.0
  %369 = vmatpush.msra.mxu0 0.0
  %370 = vmatpush.msra.mxu0 0.0
  %v371 = vand.u32 %v100, 4294901760
  %372 = vmatpush.msra.mxu0 %v371
  %v373 = vand.u32 %v99, 4294901760
  %374 = vmatpush.msra.mxu0 %v373
  %v375 = vand.u32 %v98, 4294901760
  %376 = vmatpush.msra.mxu0 %v375
  %v377 = vand.u32 %v97, 4294901760
  %378 = vmatpush.msra.mxu0 %v377
  %v379 = vand.u32 %v107, 4294901760
  %380 = vmatmul.f32.gmra.mxu0 %v379
  %v381 = vpop.f32.mrf.mxu0
  %v382 = vadd.f32 %v345, %v381
  %v383 = vand.u32 %v110, 4294901760
  %384 = vmatmul.f32.gmra.mxu0 %v383
  %v385 = vpop.f32.mrf.mxu0
  %v386 = vadd.f32 %v349, %v385
  %v387 = vand.u32 %v113, 4294901760
  %388 = vmatmul.f32.gmra.mxu0 %v387
  %v389 = vpop.f32.mrf.mxu0
  %v390 = vadd.f32 %v353, %v389
  %v391 = vand.u32 %v116, 4294901760
  %392 = vmatmul.f32.gmra.mxu0 %v391
  %v393 = vpop.f32.mrf.mxu0
  %v394 = vadd.f32 %v357, %v393
  %395 = vdwg.mxu0
  %396 = vst [vmem:[%s4] sm:$0xff] %v382
  %397 = vst [vmem:[%s4 + $0x8] sm:$0xff] %v386
  %398 = vst [vmem:[%s4 + $0x10] sm:$0xff] %v390
  %399 = vst [vmem:[%s4 + $0x18] sm:$0xff] %v394
  // Predicated region
  $region18: #{discrete_prosodic_net.1} parent=0 // pred_check
    _
  $region19: #{discrete_prosodic_net.1} parent=0 // pred_check_branch
    %401 = sbr.rel (0) target = $region21
  $region20: #{discrete_prosodic_net.1} parent=0 // pred_region
    _
  $region21: #{discrete_prosodic_net.1} parent=0 // pred_fallthru
    _
  // Predicated region
  $region22: #{discrete_prosodic_net.1} parent=0 // pred_check
    _
  $region23: #{discrete_prosodic_net.1} parent=0 // pred_check_branch
    %403 = sbr.rel (0) target = $region25
  $region24: #{discrete_prosodic_net.1} parent=0 // pred_region
    _
  $region25: #{discrete_prosodic_net.1} parent=0 // pred_fallthru
    _

</llo_original>
